<compile_context>
chip_gen: v6e
topology: v6e:2x2x1
jax: 0.10.0
libtpu: 0.0.40
codegen_flags: <defaults>
</compile_context>

<pallas_src>
import functools

import jax
import jax.numpy as jnp
from jax import lax
from jax.experimental import pallas as pl
from jax.experimental.pallas import tpu as pltpu

NUM_GROUPS = 6
GN_EPS = 1e-5


def _projection_kernel(base_ref, w_ref, gamma_ref, beta_ref, gmat_ref, proj_ref,
                       *refs, c, bt, inv_n, inv_denom, sigmoid_out):
    """One grid step processes `bt` samples. base_ref block = (bt, c, h*w)."""
    if sigmoid_out:
        wp_ref, out_ref = refs
    else:
        (out_ref,) = refs

    # Constant inputs: constant index_map -> DMA'd once, resident across steps.
    wmat = w_ref[...]          # (c, c)   1x1 conv weight (C -> C, no bias)
    gamma = gamma_ref[...]     # (c, 1)   GroupNorm affine scale
    beta = beta_ref[...]       # (c, 1)   GroupNorm affine bias
    gmat = gmat_ref[...]       # (c, c)   0/1 group-membership matrix
    proj = proj_ref[...]       # (hw, m)  0/1 row/col pixel-ownership matrix
    wp = wp_ref[...] if sigmoid_out else None   # (c, 1) prediction conv weight

    def sample_body(i, carry):
        x_in = base_ref[i]                                  # (c, hw), input dtype
        x = x_in.astype(jnp.float32)

        # --- 1x1 conv (C -> C): channel-mixing matmul, lanes = h*w (MXU) ---
        y = jnp.dot(wmat, x, preferred_element_type=jnp.float32)      # (c, hw)

        # --- GroupNorm(6, C): two-pass stats, group combine via tiny matmuls ---
        s = jnp.sum(y, axis=1, keepdims=True)                          # (c, 1)
        mean_c = jnp.dot(gmat, s, preferred_element_type=jnp.float32) * inv_n
        yc = y - mean_c                                                # centered
        sq = jnp.sum(yc * yc, axis=1, keepdims=True)                   # (c, 1)
        var_c = jnp.dot(gmat, sq, preferred_element_type=jnp.float32) * inv_n
        scale_c = lax.rsqrt(var_c + GN_EPS) * gamma                    # folded affine
        feat = jnp.maximum(yc * scale_c + beta, 0.0)                   # (c, hw)

        # --- prediction 1x1 conv (C -> 1) on base; Dropout2d identity at eval.
        #     Fused into the feature projection (one pair of proj matmuls). ---
        if sigmoid_out:
            p = jnp.sum(x * wp, axis=0, keepdims=True)                 # (1, hw)
            stacked = jnp.concatenate([feat, p], axis=0)               # (c+1, hw)
        else:
            stacked = feat

        # --- project pooling: (F @ P) * (1/n) @ P^T ---
        pooled = lax.dot_general(stacked, proj, (((1,), (0,)), ((), ())),
                                 preferred_element_type=jnp.float32) * inv_denom
        full = lax.dot_general(pooled, proj, (((1,), (1,)), ((), ())),
                               preferred_element_type=jnp.float32)     # (rows, hw)

        # --- lane-dense output stores: channel ranges are sublane slices ---
        out_ref[i, 0:c, :] = x_in.astype(out_ref.dtype)
        out_ref[i, c:2 * c, :] = full[0:c, :].astype(out_ref.dtype)
        if sigmoid_out:
            out_ref[i, 2 * c:2 * c + 1, :] = jax.nn.sigmoid(
                full[c:c + 1, :]).astype(out_ref.dtype)
        return carry

    if bt <= 4:
        # Short batch tiles: static unroll (full LLO scheduler visibility).
        for i in range(bt):
            sample_body(i, None)
    else:
        # Large batch tiles: fori_loop bounds vreg live ranges (no spill blow-up).
        lax.fori_loop(0, bt, sample_body, None, unroll=2)


def _vmem_limit_bytes():
    """Generation-aware VMEM limit: ~3/4 of physical, capped at 96 MiB.

    v5e/v6e (128 MiB physical) -> 96 MiB; v7x (64 MiB physical) -> 48 MiB.
    """
    cap = 64 * 1024 * 1024
    try:
        info = pltpu.get_tpu_info()
        cap = int(getattr(info, "vmem_capacity_bytes", cap) or cap)
    except Exception:
        pass
    return int(min(cap * 3 // 4, 96 * 1024 * 1024))


def _pick_batch_tile(b, c, hw, out_c, in_itemsize, out_itemsize,
                     vmem_limit_bytes, min_grid_steps=2):
    """Batch tile sized from the VMEM limit, capped so the grid keeps >=2 steps."""
    per_sample = hw * (c * in_itemsize + out_c * out_itemsize)   # in + out block bytes
    budget = vmem_limit_bytes // 2          # headroom for weights / proj / temporaries
    bt_vmem = max(1, budget // (2 * per_sample))   # 2x: double-buffered in+out blocks
    bt_cores = max(1, -(-b // min_grid_steps))     # keep >=2 grid steps (v7x: 2 TCs)
    return int(max(1, min(bt_vmem, bt_cores, b)))


def _max_pool(x, direction):
    """MaxPool2d((1,2)) for direction 0 / MaxPool2d((2,1)) for direction 1.

    Floor mode (odd trailing rows/cols are truncated, matching PyTorch)."""
    b, c, h, w = x.shape
    if direction == 0:
        w2 = (w // 2) * 2
        return x[:, :, :, :w2].reshape(b, c, h, w // 2, 2).max(axis=-1)
    else:
        h2 = (h // 2) * 2
        return x[:, :, :h2, :].reshape(b, c, h // 2, 2, w).max(axis=3)


def projection_module(x_nchw, conv_w, gamma, beta, pred_w, *,
                      direction, max_pooling, sigmoid_out):
    """Forward pass of ProjectionModule. Input/output are NCHW."""
    b, c, h, w = x_nchw.shape
    assert c % NUM_GROUPS == 0, "GroupNorm(6, C) requires C divisible by 6"

    # Optional MaxPool2d — wrapper glue for now.
    # TODO(synk): fuse MaxPool2d into the kernel (strided lane/sublane pairwise
    #             max) to remove one full HBM pass of the input.
    base = _max_pool(x_nchw, direction) if max_pooling else x_nchw
    _, _, hh, ww = base.shape
    hw = hh * ww

    # Free (row-major metadata) reshape — no HBM transposes, no dtype upcast.
    base_flat = base.reshape(b, c, hw)
    in_dtype = base_flat.dtype
    out_dtype = in_dtype

    wmat = jnp.asarray(conv_w, jnp.float32)                       # (c, c)
    gamma2 = jnp.asarray(gamma, jnp.float32).reshape(c, 1)
    beta2 = jnp.asarray(beta, jnp.float32).reshape(c, 1)

    # Group-membership matrix: gmat[i, j] = 1 iff channels i, j share a group.
    cpg = c // NUM_GROUPS
    ch = jnp.arange(c)
    gmat = (ch[:, None] // cpg == ch[None, :] // cpg).astype(jnp.float32)   # (c, c)

    # Projection indicator: proj[j, r] = 1 iff pixel j belongs to row/col r.
    pix = jnp.arange(hw)
    if direction == 0:                  # row projection: mean over W
        owner, m, denom = pix // ww, hh, float(ww)
    else:                               # column projection: mean over H
        owner, m, denom = pix % ww, ww, float(hh)
    proj = (owner[:, None] == jnp.arange(m)[None, :]).astype(jnp.float32)   # (hw, m)

    out_c = 2 * c + (1 if sigmoid_out else 0)
    vmem_limit = _vmem_limit_bytes()
    bt = _pick_batch_tile(b, c, hw, out_c,
                          jnp.dtype(in_dtype).itemsize, jnp.dtype(out_dtype).itemsize,
                          vmem_limit)

    # Pad batch to a multiple of bt so awkward b does not force bt=1 / grid=b.
    b_pad = -(-b // bt) * bt
    if b_pad != b:
        base_flat = jnp.concatenate(
            [base_flat, jnp.zeros((b_pad - b, c, hw), in_dtype)], axis=0)

    kernel = functools.partial(
        _projection_kernel, c=c, bt=bt,
        inv_n=1.0 / float(cpg * hw), inv_denom=1.0 / denom,
        sigmoid_out=sigmoid_out)

    in_specs = [
        pl.BlockSpec((bt, c, hw), lambda i: (i, 0, 0)),   # base (bt samples / step)
        pl.BlockSpec((c, c), lambda i: (0, 0)),            # conv weight (resident)
        pl.BlockSpec((c, 1), lambda i: (0, 0)),            # gamma
        pl.BlockSpec((c, 1), lambda i: (0, 0)),            # beta
        pl.BlockSpec((c, c), lambda i: (0, 0)),            # group-membership matrix
        pl.BlockSpec((hw, m), lambda i: (0, 0)),           # projection indicator
    ]
    args = [base_flat, wmat, gamma2, beta2, gmat, proj]
    if sigmoid_out:
        in_specs.append(pl.BlockSpec((c, 1), lambda i: (0, 0)))   # prediction weight
        args.append(jnp.asarray(pred_w, jnp.float32).reshape(c, 1))

    out_flat = pl.pallas_call(
        kernel,
        out_shape=jax.ShapeDtypeStruct((b_pad, out_c, hw), out_dtype),
        grid_spec=pltpu.PrefetchScalarGridSpec(
            num_scalar_prefetch=0,
            grid=(b_pad // bt,),
            in_specs=in_specs,
            out_specs=pl.BlockSpec((bt, out_c, hw), lambda i: (i, 0, 0)),
        ),
        compiler_params=pltpu.CompilerParams(
            dimension_semantics=("parallel",),
            vmem_limit_bytes=vmem_limit,
        ),
    )(*args)

    if b_pad != b:
        out_flat = out_flat[:b]
    return out_flat.reshape(b, out_c, hh, ww)


def _reference_forward(x_nchw, conv_w, gamma, beta, pred_w, *,
                       direction, max_pooling, sigmoid_out):
    """Pure-JAX (XLA) reference mirroring the PyTorch module, for validation."""
    b, c, h, w = x_nchw.shape
    base = _max_pool(x_nchw, direction) if max_pooling else x_nchw
    _, _, hh, ww = base.shape
    basef = base.astype(jnp.float32)

    y = jnp.einsum('oc,bchw->bohw', conv_w, basef)
    cpg = c // NUM_GROUPS
    yg = y.reshape(b, NUM_GROUPS, cpg, hh, ww)
    mean = yg.mean(axis=(2, 3, 4), keepdims=True)
    var = ((yg - mean) ** 2).mean(axis=(2, 3, 4), keepdims=True)
    yn = ((yg - mean) / jnp.sqrt(var + GN_EPS)).reshape(b, c, hh, ww)
    yn = yn * gamma[None, :, None, None] + beta[None, :, None, None]
    feat = jnp.maximum(yn, 0.0)

    axis = 3 if direction == 0 else 2
    feat = jnp.mean(feat, axis=axis, keepdims=True) * jnp.ones_like(feat)
    tensors = [basef, feat]
    if sigmoid_out:
        p = jnp.einsum('oc,bchw->bohw', pred_w, basef)
        pred = jax.nn.sigmoid(jnp.mean(p, axis=axis, keepdims=True) * jnp.ones_like(p))
        tensors.append(pred)
    return jnp.concatenate(tensors, axis=1)


if __name__ == "__main__":
    key = jax.random.PRNGKey(0)
    kw, kg, kb, kp, kx = jax.random.split(key, 5)

    C = 12   # must be divisible by 6 for GroupNorm(6, C)
    # Deterministic synthetic parameters (shapes from the module __init__).
    conv_w = 0.3 * jax.random.normal(kw, (C, C), dtype=jnp.float32)     # Conv2d(C, C, 1, bias=False)
    gamma = 1.0 + 0.1 * jax.random.normal(kg, (C,), dtype=jnp.float32)  # GroupNorm weight
    beta = 0.1 * jax.random.normal(kb, (C,), dtype=jnp.float32)         # GroupNorm bias
    pred_w = 0.3 * jax.random.normal(kp, (1, C), dtype=jnp.float32)     # Conv2d(C, 1, 1, bias=False)

    cases = [
        # (batch, H, W, config)
        (2, 16, 16, dict(direction=0, max_pooling=True, sigmoid_out=True)),
        (2, 16, 16, dict(direction=1, max_pooling=False, sigmoid_out=False)),
        (2, 16, 15, dict(direction=0, max_pooling=True, sigmoid_out=True)),   # odd W (floor pool)
        (11, 16, 16, dict(direction=1, max_pooling=True, sigmoid_out=True)),  # fori_loop + batch pad
    ]
    for idx, (B, H, W, cfg) in enumerate(cases):
        kx, sub = jax.random.split(kx)
        x = jax.random.normal(sub, (B, C, H, W), dtype=jnp.float32)
        out = jax.block_until_ready(projection_module(x, conv_w, gamma, beta, pred_w, **cfg))
        ref = jax.block_until_ready(_reference_forward(x, conv_w, gamma, beta, pred_w, **cfg))
        assert out.shape == ref.shape, (out.shape, ref.shape)
        err = jnp.max(jnp.abs(out - ref))
        assert jnp.allclose(out, ref, atol=2e-4, rtol=2e-4), \
            f"mismatch for case {idx} cfg={cfg}: max abs err {err}"

    print("KERNEL_OK")
</pallas_src>

<mosaic_0001>
module attributes {stable_mosaic.version = 11 : i64} {
  func.func @_projection_kernel(%arg0: i32, %arg1: memref<1x12x128xf32, #tpu.memory_space<vmem>>, %arg2: memref<12x12xf32, #tpu.memory_space<vmem>>, %arg3: memref<12x1xf32, #tpu.memory_space<vmem>>, %arg4: memref<12x1xf32, #tpu.memory_space<vmem>>, %arg5: memref<12x12xf32, #tpu.memory_space<vmem>>, %arg6: memref<128x16xf32, #tpu.memory_space<vmem>>, %arg7: memref<12x1xf32, #tpu.memory_space<vmem>>, %arg8: memref<1x25x128xf32, #tpu.memory_space<vmem>>) attributes {dimension_semantics = [#tpu.dimension_semantics<parallel>], iteration_bounds = array<i64: 2>, scalar_prefetch = 0 : i64, scratch_operands = 0 : i64, tpu.core_type = #tpu.core_type<tc>, window_params = [{transform_indices = @transform_0, window_bounds = array<i64: 1, 12, 128>}, {pipeline_mode = #tpu.pipeline_mode<synchronous>, transform_indices = @transform_1, window_bounds = array<i64: 12, 12>}, {pipeline_mode = #tpu.pipeline_mode<synchronous>, transform_indices = @transform_2, window_bounds = array<i64: 12, 1>}, {pipeline_mode = #tpu.pipeline_mode<synchronous>, transform_indices = @transform_3, window_bounds = array<i64: 12, 1>}, {pipeline_mode = #tpu.pipeline_mode<synchronous>, transform_indices = @transform_4, window_bounds = array<i64: 12, 12>}, {pipeline_mode = #tpu.pipeline_mode<synchronous>, transform_indices = @transform_5, window_bounds = array<i64: 128, 16>}, {pipeline_mode = #tpu.pipeline_mode<synchronous>, transform_indices = @transform_6, window_bounds = array<i64: 12, 1>}, {transform_indices = @transform_7, window_bounds = array<i64: 1, 25, 128>}]} {
    %c0 = arith.constant 0 : index
    %c0_0 = arith.constant 0 : index
    %0 = vector.load %arg2[%c0, %c0_0] : memref<12x12xf32, #tpu.memory_space<vmem>>, vector<12x12xf32>
    %c0_1 = arith.constant 0 : index
    %c0_2 = arith.constant 0 : index
    %1 = vector.load %arg3[%c0_1, %c0_2] : memref<12x1xf32, #tpu.memory_space<vmem>>, vector<12x1xf32>
    %c0_3 = arith.constant 0 : index
    %c0_4 = arith.constant 0 : index
    %2 = vector.load %arg4[%c0_3, %c0_4] : memref<12x1xf32, #tpu.memory_space<vmem>>, vector<12x1xf32>
    %c0_5 = arith.constant 0 : index
    %c0_6 = arith.constant 0 : index
    %3 = vector.load %arg5[%c0_5, %c0_6] : memref<12x12xf32, #tpu.memory_space<vmem>>, vector<12x12xf32>
    %c0_7 = arith.constant 0 : index
    %c0_8 = arith.constant 0 : index
    %4 = vector.load %arg6[%c0_7, %c0_8] : memref<128x16xf32, #tpu.memory_space<vmem>>, vector<128x16xf32>
    %c0_9 = arith.constant 0 : index
    %c0_10 = arith.constant 0 : index
    %5 = vector.load %arg7[%c0_9, %c0_10] : memref<12x1xf32, #tpu.memory_space<vmem>>, vector<12x1xf32>
    %c0_11 = arith.constant 0 : index
    %c0_12 = arith.constant 0 : index
    %c0_13 = arith.constant 0 : index
    %6 = vector.load %arg1[%c0_11, %c0_12, %c0_13] : memref<1x12x128xf32, #tpu.memory_space<vmem>>, vector<1x12x128xf32>
    %7 = vector.shape_cast %6 : vector<1x12x128xf32> to vector<12x128xf32>
    %cst = arith.constant dense<0.000000e+00> : vector<12x128xf32>
    %8 = tpu.matmul %0, %7, %cst {dimension_numbers = #tpu.dot_dimension_numbers<[1], [0], [0], [1], [0, 0, 1, 1], [], []>} : vector<12x12xf32>, vector<12x128xf32>, vector<12x128xf32> -> vector<12x128xf32>
    %cst_14 = arith.constant dense<0.000000e+00> : vector<12xf32>
    %9 = vector.multi_reduction <add>, %8, %cst_14 [1] : vector<12x128xf32> to vector<12xf32>
    %10 = vector.shape_cast %9 : vector<12xf32> to vector<12x1xf32>
    %cst_15 = arith.constant dense<0.000000e+00> : vector<12x1xf32>
    %11 = tpu.matmul %3, %10, %cst_15 {dimension_numbers = #tpu.dot_dimension_numbers<[1], [0], [0], [1], [0, 0, 1, 1], [], []>} : vector<12x12xf32>, vector<12x1xf32>, vector<12x1xf32> -> vector<12x1xf32>
    %cst_16 = arith.constant 3.906250e-03 : f32
    %12 = vector.broadcast %cst_16 : f32 to vector<12x1xf32>
    %13 = arith.mulf %11, %12 : vector<12x1xf32>
    %14 = vector.broadcast %13 : vector<12x1xf32> to vector<12x128xf32>
    %15 = arith.subf %8, %14 : vector<12x128xf32>
    %16 = arith.mulf %15, %15 : vector<12x128xf32>
    %cst_17 = arith.constant dense<0.000000e+00> : vector<12xf32>
    %17 = vector.multi_reduction <add>, %16, %cst_17 [1] : vector<12x128xf32> to vector<12xf32>
    %18 = vector.shape_cast %17 : vector<12xf32> to vector<12x1xf32>
    %cst_18 = arith.constant dense<0.000000e+00> : vector<12x1xf32>
    %19 = tpu.matmul %3, %18, %cst_18 {dimension_numbers = #tpu.dot_dimension_numbers<[1], [0], [0], [1], [0, 0, 1, 1], [], []>} : vector<12x12xf32>, vector<12x1xf32>, vector<12x1xf32> -> vector<12x1xf32>
    %cst_19 = arith.constant 3.906250e-03 : f32
    %20 = vector.broadcast %cst_19 : f32 to vector<12x1xf32>
    %21 = arith.mulf %19, %20 : vector<12x1xf32>
    %cst_20 = arith.constant 9.99999974E-6 : f32
    %22 = vector.broadcast %cst_20 : f32 to vector<12x1xf32>
    %23 = arith.addf %21, %22 : vector<12x1xf32>
    %24 = math.rsqrt %23 : vector<12x1xf32>
    %25 = arith.mulf %24, %1 : vector<12x1xf32>
    %26 = vector.broadcast %25 : vector<12x1xf32> to vector<12x128xf32>
    %27 = arith.mulf %15, %26 : vector<12x128xf32>
    %28 = vector.broadcast %2 : vector<12x1xf32> to vector<12x128xf32>
    %29 = arith.addf %27, %28 : vector<12x128xf32>
    %cst_21 = arith.constant 0.000000e+00 : f32
    %30 = vector.broadcast %cst_21 : f32 to vector<12x128xf32>
    %31 = arith.maximumf %29, %30 : vector<12x128xf32>
    %32 = vector.broadcast %5 : vector<12x1xf32> to vector<12x128xf32>
    %33 = arith.mulf %7, %32 : vector<12x128xf32>
    %cst_22 = arith.constant dense<0.000000e+00> : vector<128xf32>
    %34 = vector.multi_reduction <add>, %33, %cst_22 [0] : vector<12x128xf32> to vector<128xf32>
    %35 = vector.shape_cast %34 : vector<128xf32> to vector<1x128xf32>
    %36 = tpu.concatenate %31, %35 in 0 : vector<12x128xf32>, vector<1x128xf32> -> vector<13x128xf32>
    %cst_23 = arith.constant dense<0.000000e+00> : vector<13x16xf32>
    %37 = tpu.matmul %36, %4, %cst_23 {dimension_numbers = #tpu.dot_dimension_numbers<[1], [0], [0], [1], [0, 0, 1, 1], [], []>} : vector<13x128xf32>, vector<128x16xf32>, vector<13x16xf32> -> vector<13x16xf32>
    %cst_24 = arith.constant 1.250000e-01 : f32
    %38 = vector.broadcast %cst_24 : f32 to vector<13x16xf32>
    %39 = arith.mulf %37, %38 : vector<13x16xf32>
    %cst_25 = arith.constant dense<0.000000e+00> : vector<13x128xf32>
    %40 = tpu.matmul %39, %4, %cst_25 {dimension_numbers = #tpu.dot_dimension_numbers<[1], [1], [0], [0], [0, 0, 1, 0], [], []>} : vector<13x16xf32>, vector<128x16xf32>, vector<13x128xf32> -> vector<13x128xf32>
    %c0_26 = arith.constant 0 : index
    %c0_27 = arith.constant 0 : index
    %c0_28 = arith.constant 0 : index
    %41 = vector.load %arg8[%c0_26, %c0_27, %c0_28] : memref<1x25x128xf32, #tpu.memory_space<vmem>>, vector<1x12x128xf32>
    %42 = vector.shape_cast %41 : vector<1x12x128xf32> to vector<12x128xf32>
    %43 = vector.shape_cast %7 : vector<12x128xf32> to vector<1x12x128xf32>
    tpu.vector_store %arg8[%c0_26, %c0_27, %c0_28], %43 {strides = array<i32>} : memref<1x25x128xf32, #tpu.memory_space<vmem>>, vector<1x12x128xf32>,
    %44 = vector.extract_strided_slice %40 {offsets = [0, 0], sizes = [12, 128], strides = [1, 1]} : vector<13x128xf32> to vector<12x128xf32>
    %c0_29 = arith.constant 0 : index
    %c12 = arith.constant 12 : index
    %c0_30 = arith.constant 0 : index
    %45 = vector.load %arg8[%c0_29, %c12, %c0_30] : memref<1x25x128xf32, #tpu.memory_space<vmem>>, vector<1x12x128xf32>
    %46 = vector.shape_cast %45 : vector<1x12x128xf32> to vector<12x128xf32>
    %47 = vector.shape_cast %44 : vector<12x128xf32> to vector<1x12x128xf32>
    tpu.vector_store %arg8[%c0_29, %c12, %c0_30], %47 {strides = array<i32>} : memref<1x25x128xf32, #tpu.memory_space<vmem>>, vector<1x12x128xf32>,
    %48 = vector.extract_strided_slice %40 {offsets = [12, 0], sizes = [1, 128], strides = [1, 1]} : vector<13x128xf32> to vector<1x128xf32>
    %49 = arith.negf %48 : vector<1x128xf32>
    %50 = math.exp %49 : vector<1x128xf32>
    %cst_31 = arith.constant 1.000000e+00 : f32
    %51 = vector.broadcast %cst_31 : f32 to vector<1x128xf32>
    %52 = arith.addf %51, %50 : vector<1x128xf32>
    %53 = arith.divf %51, %52 : vector<1x128xf32>
    %c0_32 = arith.constant 0 : index
    %c24 = arith.constant 24 : index
    %c0_33 = arith.constant 0 : index
    %54 = vector.load %arg8[%c0_32, %c24, %c0_33] : memref<1x25x128xf32, #tpu.memory_space<vmem>>, vector<1x1x128xf32>
    %55 = vector.shape_cast %54 : vector<1x1x128xf32> to vector<1x128xf32>
    %56 = vector.shape_cast %53 : vector<1x128xf32> to vector<1x1x128xf32>
    tpu.vector_store %arg8[%c0_32, %c24, %c0_33], %56 {strides = array<i32>} : memref<1x25x128xf32, #tpu.memory_space<vmem>>, vector<1x1x128xf32>,
    return
  }
  func.func @transform_0(%arg0: i32) -> (i32, i32, i32) {
    %c0_i32 = arith.constant 0 : i32
    %c0_i32_0 = arith.constant 0 : i32
    %c0_i32_1 = arith.constant 0 : i32
    return %arg0, %c0_i32, %c0_i32_0 : i32, i32, i32
  }
  func.func @transform_1(%arg0: i32) -> (i32, i32) {
    %c0_i32 = arith.constant 0 : i32
    %c0_i32_0 = arith.constant 0 : i32
    %c0_i32_1 = arith.constant 0 : i32
    return %c0_i32, %c0_i32_0 : i32, i32
  }
  func.func @transform_2(%arg0: i32) -> (i32, i32) {
    %c0_i32 = arith.constant 0 : i32
    %c0_i32_0 = arith.constant 0 : i32
    %c0_i32_1 = arith.constant 0 : i32
    return %c0_i32, %c0_i32_0 : i32, i32
  }
  func.func @transform_3(%arg0: i32) -> (i32, i32) {
    %c0_i32 = arith.constant 0 : i32
    %c0_i32_0 = arith.constant 0 : i32
    %c0_i32_1 = arith.constant 0 : i32
    return %c0_i32, %c0_i32_0 : i32, i32
  }
  func.func @transform_4(%arg0: i32) -> (i32, i32) {
    %c0_i32 = arith.constant 0 : i32
    %c0_i32_0 = arith.constant 0 : i32
    %c0_i32_1 = arith.constant 0 : i32
    return %c0_i32, %c0_i32_0 : i32, i32
  }
  func.func @transform_5(%arg0: i32) -> (i32, i32) {
    %c0_i32 = arith.constant 0 : i32
    %c0_i32_0 = arith.constant 0 : i32
    %c0_i32_1 = arith.constant 0 : i32
    return %c0_i32, %c0_i32_0 : i32, i32
  }
  func.func @transform_6(%arg0: i32) -> (i32, i32) {
    %c0_i32 = arith.constant 0 : i32
    %c0_i32_0 = arith.constant 0 : i32
    %c0_i32_1 = arith.constant 0 : i32
    return %c0_i32, %c0_i32_0 : i32, i32
  }
  func.func @transform_7(%arg0: i32) -> (i32, i32, i32) {
    %c0_i32 = arith.constant 0 : i32
    %c0_i32_0 = arith.constant 0 : i32
    %c0_i32_1 = arith.constant 0 : i32
    return %arg0, %c0_i32, %c0_i32_0 : i32, i32, i32
  }
}

</mosaic_0001>

<llo_original>
// kernel: tpu_custom_call.1
$region0: #{tpu_custom_call.1}
  #allocation0 [shape = 'u32[]', space=smem, size = 0x4, offset = 0x4, fixed_abs, tag = 'smem constant byte address 0x4 - core index']
  #allocation1 [shape = 'u32[144,128]{1,0:T(1,128)}', space=vmem, size = 0x12000, scoped, tag = 'internal scratch']
  %s0 = inlined_call_operand.vmem [shape: f32[2,12,128], index: 0, kind: input, shape index: {}]
  %s1 = inlined_call_operand.vmem [shape: f32[12,12], index: 1, kind: input, shape index: {}]
  %s2 = inlined_call_operand.vmem [shape: f32[12,1], index: 2, kind: input, shape index: {}]
  %s3 = inlined_call_operand.vmem [shape: f32[12,1], index: 3, kind: input, shape index: {}]
  %s4 = inlined_call_operand.vmem [shape: f32[12,12], index: 4, kind: input, shape index: {}]
  %s5 = inlined_call_operand.vmem [shape: f32[128,16], index: 5, kind: input, shape index: {}]
  %s6 = inlined_call_operand.vmem [shape: f32[12,1], index: 6, kind: input, shape index: {}]
  %s7 = inlined_call_operand.vmem [shape: f32[2,25,128], index: 7, kind: output, shape index: {}]
  %s8 = sld [smem:[#allocation0]]
  $region61: #{tpu_custom_call.1} parent=0
    _
  %s10 = ssub.s32 1, %s8
  %s11 = scalar_select 0, %s10, %s8
  loop: start=0, step=1, limit=4
  $region2: #{tpu_custom_call.1} parent=0 // loop_pre_header
    _
  $region3: #{tpu_custom_call.1} parent=0 // loop_header
    %s13 = sphi 0, %s17
    %p14 = scmp.ge.s32.totalorder %s13, 4
    %s23 = sphi 0, %s25
    %s26 = sphi 0, %s23
    %s27 = sphi 0, %s26
    %s43 = sphi 0, %s27
    %s47 = sphi 0, %s47
    %s49 = sphi 0, %s47
    %s50 = sphi 0, %s49
    %s64 = sphi 0, %s50
    %s68 = sphi 0, %s68
    %s70 = sphi 0, %s68
    %s71 = sphi 0, %s70
    %s85 = sphi 0, %s71
    %s89 = sphi 0, %s89
    %s91 = sphi 0, %s89
    %s92 = sphi 0, %s91
    %s106 = sphi 0, %s92
    %s110 = sphi 0, %s110
    %s112 = sphi 0, %s110
    %s113 = sphi 0, %s112
    %s127 = sphi 0, %s113
    %s131 = sphi 0, %s131
    %s133 = sphi 0, %s131
    %s134 = sphi 0, %s133
    %s148 = sphi 0, %s134
    %s152 = sphi 0, %s152
    %s154 = sphi 0, %s152
    %s155 = sphi 0, %s154
    %s169 = sphi 0, %s155
    %s175 = sphi 0, %s177
    %s178 = sphi 0, %s175
    %s179 = sphi 0, %s178
    %s195 = sphi 0, %s179
  $region4: #{tpu_custom_call.1} parent=0 // loop_header_branch
    %16 = sbr.rel (%p14) target = $region8
  $region5: #{tpu_custom_call.1} parent=0 // loop_body
    %s18 = ssub.s32 %s13, 1
    %s19 = ssub.s32 %s13, 2
    %s20 = sadd.s32 %s13, 1
    %s21 = ssub.s32 %s13, %s20
    %p22 = scmp.eq.s32.totalorder %s21, 0
    %s24 = sadd.s32 %s23, 1
    %s25 = scalar_select %p22, %s23, %s24
    %p28 = pneg %p22
    %p29 = scmp.eq.s32.totalorder %s13, 1
    %p30 = por %p28, %p29
    %p31 = scmp.ne.s32.totalorder %s23, %s26
    %p32 = scmp.eq.s32.totalorder %s13, 0
    %p33 = por %p31, %p32
    %p34 = scmp.ne.s32.totalorder %s23, %s26
    %p35 = scmp.eq.s32.totalorder %s18, 1
    %p36 = por %p34, %p35
    %p37 = scmp.ne.s32.totalorder %s26, %s27
    %p38 = scmp.eq.s32.totalorder %s18, 0
    %p39 = por %p37, %p38
    %p40 = scmp.ne.s32.totalorder %s26, %s27
    %p41 = scmp.eq.s32.totalorder %s19, 1
    %p42 = por %p40, %p41
    %p44 = scmp.ne.s32.totalorder %s27, %s43
    %p45 = scmp.eq.s32.totalorder %s19, 0
    %p46 = por %p44, %p45
    %s48 = sadd.s32 %s47, 1
    %p51 = scmp.eq.s32.totalorder %s13, 1
    %p52 = scmp.ne.s32.totalorder %s47, %s49
    %p53 = scmp.eq.s32.totalorder %s13, 0
    %p54 = por %p52, %p53
    %p55 = scmp.ne.s32.totalorder %s47, %s49
    %p56 = scmp.eq.s32.totalorder %s18, 1
    %p57 = por %p55, %p56
    %p58 = scmp.ne.s32.totalorder %s49, %s50
    %p59 = scmp.eq.s32.totalorder %s18, 0
    %p60 = por %p58, %p59
    %p61 = scmp.ne.s32.totalorder %s49, %s50
    %p62 = scmp.eq.s32.totalorder %s19, 1
    %p63 = por %p61, %p62
    %p65 = scmp.ne.s32.totalorder %s50, %s64
    %p66 = scmp.eq.s32.totalorder %s19, 0
    %p67 = por %p65, %p66
    %s69 = sadd.s32 %s68, 1
    %p72 = scmp.eq.s32.totalorder %s13, 1
    %p73 = scmp.ne.s32.totalorder %s68, %s70
    %p74 = scmp.eq.s32.totalorder %s13, 0
    %p75 = por %p73, %p74
    %p76 = scmp.ne.s32.totalorder %s68, %s70
    %p77 = scmp.eq.s32.totalorder %s18, 1
    %p78 = por %p76, %p77
    %p79 = scmp.ne.s32.totalorder %s70, %s71
    %p80 = scmp.eq.s32.totalorder %s18, 0
    %p81 = por %p79, %p80
    %p82 = scmp.ne.s32.totalorder %s70, %s71
    %p83 = scmp.eq.s32.totalorder %s19, 1
    %p84 = por %p82, %p83
    %p86 = scmp.ne.s32.totalorder %s71, %s85
    %p87 = scmp.eq.s32.totalorder %s19, 0
    %p88 = por %p86, %p87
    %s90 = sadd.s32 %s89, 1
    %p93 = scmp.eq.s32.totalorder %s13, 1
    %p94 = scmp.ne.s32.totalorder %s89, %s91
    %p95 = scmp.eq.s32.totalorder %s13, 0
    %p96 = por %p94, %p95
    %p97 = scmp.ne.s32.totalorder %s89, %s91
    %p98 = scmp.eq.s32.totalorder %s18, 1
    %p99 = por %p97, %p98
    %p100 = scmp.ne.s32.totalorder %s91, %s92
    %p101 = scmp.eq.s32.totalorder %s18, 0
    %p102 = por %p100, %p101
    %p103 = scmp.ne.s32.totalorder %s91, %s92
    %p104 = scmp.eq.s32.totalorder %s19, 1
    %p105 = por %p103, %p104
    %p107 = scmp.ne.s32.totalorder %s92, %s106
    %p108 = scmp.eq.s32.totalorder %s19, 0
    %p109 = por %p107, %p108
    %s111 = sadd.s32 %s110, 1
    %p114 = scmp.eq.s32.totalorder %s13, 1
    %p115 = scmp.ne.s32.totalorder %s110, %s112
    %p116 = scmp.eq.s32.totalorder %s13, 0
    %p117 = por %p115, %p116
    %p118 = scmp.ne.s32.totalorder %s110, %s112
    %p119 = scmp.eq.s32.totalorder %s18, 1
    %p120 = por %p118, %p119
    %p121 = scmp.ne.s32.totalorder %s112, %s113
    %p122 = scmp.eq.s32.totalorder %s18, 0
    %p123 = por %p121, %p122
    %p124 = scmp.ne.s32.totalorder %s112, %s113
    %p125 = scmp.eq.s32.totalorder %s19, 1
    %p126 = por %p124, %p125
    %p128 = scmp.ne.s32.totalorder %s113, %s127
    %p129 = scmp.eq.s32.totalorder %s19, 0
    %p130 = por %p128, %p129
    %s132 = sadd.s32 %s131, 1
    %p135 = scmp.eq.s32.totalorder %s13, 1
    %p136 = scmp.ne.s32.totalorder %s131, %s133
    %p137 = scmp.eq.s32.totalorder %s13, 0
    %p138 = por %p136, %p137
    %p139 = scmp.ne.s32.totalorder %s131, %s133
    %p140 = scmp.eq.s32.totalorder %s18, 1
    %p141 = por %p139, %p140
    %p142 = scmp.ne.s32.totalorder %s133, %s134
    %p143 = scmp.eq.s32.totalorder %s18, 0
    %p144 = por %p142, %p143
    %p145 = scmp.ne.s32.totalorder %s133, %s134
    %p146 = scmp.eq.s32.totalorder %s19, 1
    %p147 = por %p145, %p146
    %p149 = scmp.ne.s32.totalorder %s134, %s148
    %p150 = scmp.eq.s32.totalorder %s19, 0
    %p151 = por %p149, %p150
    %s153 = sadd.s32 %s152, 1
    %p156 = scmp.eq.s32.totalorder %s13, 1
    %p157 = scmp.ne.s32.totalorder %s152, %s154
    %p158 = scmp.eq.s32.totalorder %s13, 0
    %p159 = por %p157, %p158
    %p160 = scmp.ne.s32.totalorder %s152, %s154
    %p161 = scmp.eq.s32.totalorder %s18, 1
    %p162 = por %p160, %p161
    %p163 = scmp.ne.s32.totalorder %s154, %s155
    %p164 = scmp.eq.s32.totalorder %s18, 0
    %p165 = por %p163, %p164
    %p166 = scmp.ne.s32.totalorder %s154, %s155
    %p167 = scmp.eq.s32.totalorder %s19, 1
    %p168 = por %p166, %p167
    %p170 = scmp.ne.s32.totalorder %s155, %s169
    %p171 = scmp.eq.s32.totalorder %s19, 0
    %p172 = por %p170, %p171
    %s173 = ssub.s32 %s13, %s20
    %p174 = scmp.eq.s32.totalorder %s173, 0
    %s176 = sadd.s32 %s175, 1
    %s177 = scalar_select %p174, %s175, %s176
    %p180 = pneg %p174
    %p181 = scmp.eq.s32.totalorder %s13, 1
    %p182 = por %p180, %p181
    %p183 = scmp.ne.s32.totalorder %s175, %s178
    %p184 = scmp.eq.s32.totalorder %s13, 0
    %p185 = por %p183, %p184
    %p186 = scmp.ne.s32.totalorder %s175, %s178
    %p187 = scmp.eq.s32.totalorder %s18, 1
    %p188 = por %p186, %p187
    %p189 = scmp.ne.s32.totalorder %s178, %s179
    %p190 = scmp.eq.s32.totalorder %s18, 0
    %p191 = por %p189, %p190
    %p192 = scmp.ne.s32.totalorder %s178, %s179
    %p193 = scmp.eq.s32.totalorder %s19, 1
    %p194 = por %p192, %p193
    %p196 = scmp.ne.s32.totalorder %s179, %s195
    %p197 = scmp.eq.s32.totalorder %s19, 0
    %p198 = por %p196, %p197
    %p199 = scmp.le.s32.totalorder 1, %s13
    %p200 = scmp.lt.s32.totalorder %s13, 3
    %p201 = pnand %p199, %p200
    %p202 = pneg %p201
    // Predicated region
    $region9: #{tpu_custom_call.1} parent=5 // pred_check
      _
    $region10: #{tpu_custom_call.1} parent=5 // pred_check_branch
      %204 = sbr.rel (%p201) target = $region12
    $region11: #{tpu_custom_call.1} parent=5 // pred_region
      %s205 = ssub.s32 %s13, 1
      // Predicated region
      $region13: #{tpu_custom_call.1} parent=11 // pred_check
        %p206 = pneg %p60
      $region14: #{tpu_custom_call.1} parent=11 // pred_check_branch
        %208 = sbr.rel (%p206) target = $region16
      $region15: #{tpu_custom_call.1} parent=11 // pred_region
        _
      $region16: #{tpu_custom_call.1} parent=11 // pred_fallthru
        _
      // Predicated region
      $region17: #{tpu_custom_call.1} parent=11 // pred_check
        %p209 = pneg %p81
      $region18: #{tpu_custom_call.1} parent=11 // pred_check_branch
        %211 = sbr.rel (%p209) target = $region20
      $region19: #{tpu_custom_call.1} parent=11 // pred_region
        _
      $region20: #{tpu_custom_call.1} parent=11 // pred_fallthru
        _
      // Predicated region
      $region21: #{tpu_custom_call.1} parent=11 // pred_check
        %p212 = pneg %p102
      $region22: #{tpu_custom_call.1} parent=11 // pred_check_branch
        %214 = sbr.rel (%p212) target = $region24
      $region23: #{tpu_custom_call.1} parent=11 // pred_region
        _
      $region24: #{tpu_custom_call.1} parent=11 // pred_fallthru
        _
      // Predicated region
      $region25: #{tpu_custom_call.1} parent=11 // pred_check
        %p215 = pneg %p123
      $region26: #{tpu_custom_call.1} parent=11 // pred_check_branch
        %217 = sbr.rel (%p215) target = $region28
      $region27: #{tpu_custom_call.1} parent=11 // pred_region
        _
      $region28: #{tpu_custom_call.1} parent=11 // pred_fallthru
        _
      // Predicated region
      $region29: #{tpu_custom_call.1} parent=11 // pred_check
        %p218 = pneg %p144
      $region30: #{tpu_custom_call.1} parent=11 // pred_check_branch
        %220 = sbr.rel (%p218) target = $region32
      $region31: #{tpu_custom_call.1} parent=11 // pred_region
        _
      $region32: #{tpu_custom_call.1} parent=11 // pred_fallthru
        _
      // Predicated region
      $region33: #{tpu_custom_call.1} parent=11 // pred_check
        %p221 = pneg %p165
      $region34: #{tpu_custom_call.1} parent=11 // pred_check_branch
        %223 = sbr.rel (%p221) target = $region36
      $region35: #{tpu_custom_call.1} parent=11 // pred_region
        _
      $region36: #{tpu_custom_call.1} parent=11 // pred_fallthru
        _
    $region12: #{tpu_custom_call.1} parent=5 // pred_fallthru
      _
    %p224 = scmp.lt.s32.totalorder %s13, 2
    // Predicated region
    $region37: #{tpu_custom_call.1} parent=5 // pred_check
      %p225 = pneg %p224
    $region38: #{tpu_custom_call.1} parent=5 // pred_check_branch
      %227 = sbr.rel (%p225) target = $region40
    $region39: #{tpu_custom_call.1} parent=5 // pred_region
      // Predicated region
      $region41: #{tpu_custom_call.1} parent=39 // pred_check
        %p228 = pneg %p33
      $region42: #{tpu_custom_call.1} parent=39 // pred_check_branch
        %230 = sbr.rel (%p228) target = $region44
      $region43: #{tpu_custom_call.1} parent=39 // pred_region
        %p231 = scmp.lt.s32.totalorder %s13, 1
        %s232 = scalar_select %p231, %s13, 1
        %s233 = smul.addr %s232, 2
        %s234 = smul.addr %s233, 8
        %s235 = scalar_lea.vmem %s0, %s234
      $region44: #{tpu_custom_call.1} parent=39 // pred_fallthru
        _
    $region40: #{tpu_custom_call.1} parent=5 // pred_fallthru
      _
    %p236 = scmp.le.s32.totalorder 1, %s13
    %p237 = scmp.lt.s32.totalorder %s13, 3
    %p238 = pnand %p236, %p237
    %p239 = pneg %p238
    // Predicated region
    $region45: #{tpu_custom_call.1} parent=5 // pred_check
      _
    $region46: #{tpu_custom_call.1} parent=5 // pred_check_branch
      %241 = sbr.rel (%p238) target = $region48
    $region47: #{tpu_custom_call.1} parent=5 // pred_region
      %s242 = ssub.s32 %s13, 1
      %p243 = scmp.lt.s32.totalorder %s18, 1
      %s244 = scalar_select %p243, %s18, 1
      %s245 = smul.addr %s244, 2
      %s246 = smul.addr %s245, 8
      %s247 = scalar_lea.vmem %s0, %s246
      %p248 = pneg %p39
      %p249 = pneg %p36
      %p250 = pneg %p60
      %p251 = pneg %p57
      %p252 = pneg %p81
      %p253 = pneg %p78
      %p254 = pneg %p102
      %p255 = pneg %p99
      %p256 = pneg %p123
      %p257 = pneg %p120
      %p258 = pneg %p144
      %p259 = pneg %p141
      %p260 = pneg %p165
      %p261 = pneg %p162
      %p262 = pneg %p191
      %p263 = pneg %p188
      %p264 = scmp.lt.s32.totalorder %s18, 1
      %s265 = scalar_select %p264, %s18, 1
      %s266 = smul.addr %s265, 4
      %s267 = smul.addr %s266, 8
      %s268 = scalar_lea.vmem %s7, %s267
      %p269 = scmp.lt.s32.totalorder %s18, 1
      %s270 = scalar_select %p269, %s18, 1
      %s271 = smul.addr %s270, 2
      %s272 = smul.addr %s271, 8
      %s273 = scalar_lea.vmem %s0, %s272
      %p274 = scmp.lt.s32.totalorder %s18, 1
      %s275 = scalar_select %p274, %s18, 1
      %s276 = smul.addr %s275, 4
      %s277 = smul.addr %s276, 8
      %s278 = scalar_lea.vmem %s7, %s277
      %v279 = vld [vmem:[%s1] sm:$0xff]
      %v280 = vld [vmem:[%s1 + $0x8] sm:$0xf]
      %v281 = vld [vmem:[%s2] sm:$0xff]
      %v282 = vld [vmem:[%s2 + $0x8] sm:$0xf]
      %v283 = vld [vmem:[%s3] sm:$0xff]
      %v284 = vld [vmem:[%s3 + $0x8] sm:$0xf]
      %v285 = vld [vmem:[%s4] sm:$0xff]
      %v286 = vld [vmem:[%s4 + $0x8] sm:$0xf]
      %v287 = vld [vmem:[%s5] sm:$0xff]
      %v288 = vld [vmem:[%s5 + $0x8] sm:$0xff]
      %v289 = vld [vmem:[%s5 + $0x10] sm:$0xff]
      %v290 = vld [vmem:[%s5 + $0x18] sm:$0xff]
      %v291 = vld [vmem:[%s5 + $0x20] sm:$0xff]
      %v292 = vld [vmem:[%s5 + $0x28] sm:$0xff]
      %v293 = vld [vmem:[%s5 + $0x30] sm:$0xff]
      %v294 = vld [vmem:[%s5 + $0x38] sm:$0xff]
      %v295 = vld [vmem:[%s5 + $0x40] sm:$0xff]
      %v296 = vld [vmem:[%s5 + $0x48] sm:$0xff]
      %v297 = vld [vmem:[%s5 + $0x50] sm:$0xff]
      %v298 = vld [vmem:[%s5 + $0x58] sm:$0xff]
      %v299 = vld [vmem:[%s5 + $0x60] sm:$0xff]
      %v300 = vld [vmem:[%s5 + $0x68] sm:$0xff]
      %v301 = vld [vmem:[%s5 + $0x70] sm:$0xff]
      %v302 = vld [vmem:[%s5 + $0x78] sm:$0xff]
      %v303 = vld [vmem:[%s6] sm:$0xff]
      %v304 = vld [vmem:[%s6 + $0x8] sm:$0xf]
      %v305 = vld [vmem:[%s273] sm:$0xff]
      %v306 = vld [vmem:[%s273 + $0x8] sm:$0xf]
      %vm307 = vcmask 97280
      %v309 = vsel %vm307, %v279, 0
      %v312 = vsel %vm307, %v280, 0
      %vm314 = vcmask 1043456
      %v316 = vsel %vm314, %v306, 0
      %318 = vmatprep.subr.mxu0 0.0
      %319 = vmatpush1.msra.mxu0 0.0
      %320 = vmatprep.subr.mxu0 0.0
      %321 = vmatpush1.msra.mxu0 0.0
      %322 = vmatprep.subr.mxu0 0.0
      %323 = vmatpush1.msra.mxu0 0.0
      %324 = vmatprep.subr.mxu0 0.0
      %325 = vmatpush1.msra.mxu0 0.0
      %326 = vmatprep.subr.mxu0 0.0
      %327 = vmatpush1.msra.mxu0 0.0
      %328 = vmatprep.subr.mxu0 0.0
      %329 = vmatpush1.msra.mxu0 0.0
      %330 = vmatprep.subr.mxu0 0.0
      %331 = vmatpush1.msra.mxu0 0.0
      %332 = vmatprep.subr.mxu0 0.0
      %333 = vmatpush1.msra.mxu0 0.0
      %334 = vmatprep.subr.mxu0 0.0
      %335 = vmatpush1.msra.mxu0 0.0
      %336 = vmatprep.subr.mxu0 0.0
      %337 = vmatpush1.msra.mxu0 0.0
      %338 = vmatprep.subr.mxu0 0.0
      %339 = vmatpush1.msra.mxu0 0.0
      %340 = vmatprep.subr.mxu0 0.0
      %341 = vmatpush1.msra.mxu0 0.0
      %342 = vmatprep.subr.mxu0 0.0
      %343 = vmatpush1.msra.mxu0 0.0
      %344 = vmatprep.subr.mxu0 0.0
      %345 = vmatpush1.msra.mxu0 0.0
      %346 = vmatprep.subr.mxu0 0.0
      %347 = vmatpush1.msra.mxu0 %v316
      %348 = vmatprep.subr.mxu0 0.0
      %349 = vmatpush1.msra.mxu0 %v305
      %350 = vmatprep.subr.mxu0 0.0
      %351 = vmatpush2.msra.mxu0 0.0
      %352 = vmatprep.subr.mxu0 0.0
      %353 = vmatpush2.msra.mxu0 0.0
      %354 = vmatprep.subr.mxu0 0.0
      %355 = vmatpush2.msra.mxu0 0.0
      %356 = vmatprep.subr.mxu0 0.0
      %357 = vmatpush2.msra.mxu0 0.0
      %358 = vmatprep.subr.mxu0 0.0
      %359 = vmatpush2.msra.mxu0 0.0
      %360 = vmatprep.subr.mxu0 0.0
      %361 = vmatpush2.msra.mxu0 0.0
      %362 = vmatprep.subr.mxu0 0.0
      %363 = vmatpush2.msra.mxu0 0.0
      %364 = vmatprep.subr.mxu0 0.0
      %365 = vmatpush2.msra.mxu0 0.0
      %366 = vmatprep.subr.mxu0 0.0
      %367 = vmatpush2.msra.mxu0 0.0
      %368 = vmatprep.subr.mxu0 0.0
      %369 = vmatpush2.msra.mxu0 0.0
      %370 = vmatprep.subr.mxu0 0.0
      %371 = vmatpush2.msra.mxu0 0.0
      %372 = vmatprep.subr.mxu0 0.0
      %373 = vmatpush2.msra.mxu0 0.0
      %374 = vmatprep.subr.mxu0 0.0
      %375 = vmatpush2.msra.mxu0 0.0
      %376 = vmatprep.subr.mxu0 0.0
      %377 = vmatpush2.msra.mxu0 0.0
      %378 = vmatprep.subr.mxu0 0.0
      %379 = vmatpush2.msra.mxu0 0.0
      %380 = vmatprep.subr.mxu0 0.0
      %381 = vmatpush2.msra.mxu0 0.0
      %382 = vmatprep.mubr.f32.mxu0 0.0
      %383 = vmatmul.mubr.f32.gmra.mxu0 %v309
      %v384 = vpop.f32.mrf.mxu0
      %v385 = vadd.f32 0.0, %v384
      %v386 = vpop.f32.mrf.mxu0
      %387 = vmatprep.mubr.f32.mxu0 0.0
      %388 = vmatmul.mubr.f32.gmra.mxu0 %v312
      %v389 = vpop.f32.mrf.mxu0
      %v390 = vadd.f32 0.0, %v389
      %v391 = vpop.f32.mrf.mxu0
      %392 = vdwg.mxu0
      %393 = vadd.xlane.f32.xlu0 %v385
      %v394 = vpop.xlane.xlu0 %393
      %v395 = vsel %vm314, %v390, 0.0
      %396 = vadd.xlane.f32.xlu0 %v395
      %v397 = vpop.xlane.xlu0 %396
      %v399 = vsel %vm307, %v285, 0
      %v402 = vsel %vm307, %v286, 0
      %v405 = vsel %vm314, %v397, 0
      %407 = vmatprep.subr.mxu0 0.0
      %408 = vmatpush1.msra.mxu0 0.0
      %409 = vmatprep.subr.mxu0 0.0
      %410 = vmatpush1.msra.mxu0 0.0
      %411 = vmatprep.subr.mxu0 0.0
      %412 = vmatpush1.msra.mxu0 0.0
      %413 = vmatprep.subr.mxu0 0.0
      %414 = vmatpush1.msra.mxu0 0.0
      %415 = vmatprep.subr.mxu0 0.0
      %416 = vmatpush1.msra.mxu0 0.0
      %417 = vmatprep.subr.mxu0 0.0
      %418 = vmatpush1.msra.mxu0 0.0
      %419 = vmatprep.subr.mxu0 0.0
      %420 = vmatpush1.msra.mxu0 0.0
      %421 = vmatprep.subr.mxu0 0.0
      %422 = vmatpush1.msra.mxu0 0.0
      %423 = vmatprep.subr.mxu0 0.0
      %424 = vmatpush1.msra.mxu0 0.0
      %425 = vmatprep.subr.mxu0 0.0
      %426 = vmatpush1.msra.mxu0 0.0
      %427 = vmatprep.subr.mxu0 0.0
      %428 = vmatpush1.msra.mxu0 0.0
      %429 = vmatprep.subr.mxu0 0.0
      %430 = vmatpush1.msra.mxu0 0.0
      %431 = vmatprep.subr.mxu0 0.0
      %432 = vmatpush1.msra.mxu0 0.0
      %433 = vmatprep.subr.mxu0 0.0
      %434 = vmatpush1.msra.mxu0 0.0
      %435 = vmatprep.subr.mxu0 0.0
      %436 = vmatpush1.msra.mxu0 %v405
      %437 = vmatprep.subr.mxu0 0.0
      %438 = vmatpush1.msra.mxu0 %v394
      %439 = vmatprep.subr.mxu0 0.0
      %440 = vmatpush2.msra.mxu0 0.0
      %441 = vmatprep.subr.mxu0 0.0
      %442 = vmatpush2.msra.mxu0 0.0
      %443 = vmatprep.subr.mxu0 0.0
      %444 = vmatpush2.msra.mxu0 0.0
      %445 = vmatprep.subr.mxu0 0.0
      %446 = vmatpush2.msra.mxu0 0.0
      %447 = vmatprep.subr.mxu0 0.0
      %448 = vmatpush2.msra.mxu0 0.0
      %449 = vmatprep.subr.mxu0 0.0
      %450 = vmatpush2.msra.mxu0 0.0
      %451 = vmatprep.subr.mxu0 0.0
      %452 = vmatpush2.msra.mxu0 0.0
      %453 = vmatprep.subr.mxu0 0.0
      %454 = vmatpush2.msra.mxu0 0.0
      %455 = vmatprep.subr.mxu0 0.0
      %456 = vmatpush2.msra.mxu0 0.0
      %457 = vmatprep.subr.mxu0 0.0
      %458 = vmatpush2.msra.mxu0 0.0
      %459 = vmatprep.subr.mxu0 0.0
      %460 = vmatpush2.msra.mxu0 0.0
      %461 = vmatprep.subr.mxu0 0.0
      %462 = vmatpush2.msra.mxu0 0.0
      %463 = vmatprep.subr.mxu0 0.0
      %464 = vmatpush2.msra.mxu0 0.0
      %465 = vmatprep.subr.mxu0 0.0
      %466 = vmatpush2.msra.mxu0 0.0
      %467 = vmatprep.subr.mxu0 0.0
      %468 = vmatpush2.msra.mxu0 0.0
      %469 = vmatprep.subr.mxu0 0.0
      %470 = vmatpush2.msra.mxu0 0.0
      %471 = vmatprep.mubr.f32.mxu0 0.0
      %472 = vmatmul.mubr.f32.gmra.mxu0 %v399
      %v473 = vpop.f32.mrf.mxu0
      %v474 = vadd.f32 0.0, %v473
      %v475 = vpop.f32.mrf.mxu0
      %476 = vmatprep.mubr.f32.mxu0 0.0
      %477 = vmatmul.mubr.f32.gmra.mxu0 %v402
      %v478 = vpop.f32.mrf.mxu0
      %v479 = vadd.f32 0.0, %v478
      %v480 = vpop.f32.mrf.mxu0
      %481 = vdwg.mxu0
      %v482 = vmul.f32 %v474, 0.00390625
      %v483 = vmul.f32 %v479, 0.00390625
      %485 = vset.pattern.permute.xlu0 0
      %486 = vperm.xlu0 %485, %v482
      %v487 = vpop.permute.xlu0 %486
      %490 = vset.pattern.permute.xlu0 0
      %491 = vperm.xlu0 %490, %v483
      %v492 = vpop.permute.xlu0 %491
      %v494 = vsub.f32 %v385, %v487
      %v495 = vsub.f32 %v390, %v492
      %v496 = vmul.f32 %v494, %v494
      %v497 = vmul.f32 %v495, %v495
      %498 = vadd.xlane.f32.xlu0 %v496
      %v499 = vpop.xlane.xlu0 %498
      %v500 = vsel %vm314, %v497, 0.0
      %501 = vadd.xlane.f32.xlu0 %v500
      %v502 = vpop.xlane.xlu0 %501
      %v504 = vsel %vm314, %v502, 0
      %506 = vmatprep.subr.mxu0 0.0
      %507 = vmatpush1.msra.mxu0 0.0
      %508 = vmatprep.subr.mxu0 0.0
      %509 = vmatpush1.msra.mxu0 0.0
      %510 = vmatprep.subr.mxu0 0.0
      %511 = vmatpush1.msra.mxu0 0.0
      %512 = vmatprep.subr.mxu0 0.0
      %513 = vmatpush1.msra.mxu0 0.0
      %514 = vmatprep.subr.mxu0 0.0
      %515 = vmatpush1.msra.mxu0 0.0
      %516 = vmatprep.subr.mxu0 0.0
      %517 = vmatpush1.msra.mxu0 0.0
      %518 = vmatprep.subr.mxu0 0.0
      %519 = vmatpush1.msra.mxu0 0.0
      %520 = vmatprep.subr.mxu0 0.0
      %521 = vmatpush1.msra.mxu0 0.0
      %522 = vmatprep.subr.mxu0 0.0
      %523 = vmatpush1.msra.mxu0 0.0
      %524 = vmatprep.subr.mxu0 0.0
      %525 = vmatpush1.msra.mxu0 0.0
      %526 = vmatprep.subr.mxu0 0.0
      %527 = vmatpush1.msra.mxu0 0.0
      %528 = vmatprep.subr.mxu0 0.0
      %529 = vmatpush1.msra.mxu0 0.0
      %530 = vmatprep.subr.mxu0 0.0
      %531 = vmatpush1.msra.mxu0 0.0
      %532 = vmatprep.subr.mxu0 0.0
      %533 = vmatpush1.msra.mxu0 0.0
      %534 = vmatprep.subr.mxu0 0.0
      %535 = vmatpush1.msra.mxu0 %v504
      %536 = vmatprep.subr.mxu0 0.0
      %537 = vmatpush1.msra.mxu0 %v499
      %538 = vmatprep.subr.mxu0 0.0
      %539 = vmatpush2.msra.mxu0 0.0
      %540 = vmatprep.subr.mxu0 0.0
      %541 = vmatpush2.msra.mxu0 0.0
      %542 = vmatprep.subr.mxu0 0.0
      %543 = vmatpush2.msra.mxu0 0.0
      %544 = vmatprep.subr.mxu0 0.0
      %545 = vmatpush2.msra.mxu0 0.0
      %546 = vmatprep.subr.mxu0 0.0
      %547 = vmatpush2.msra.mxu0 0.0
      %548 = vmatprep.subr.mxu0 0.0
      %549 = vmatpush2.msra.mxu0 0.0
      %550 = vmatprep.subr.mxu0 0.0
      %551 = vmatpush2.msra.mxu0 0.0
      %552 = vmatprep.subr.mxu0 0.0
      %553 = vmatpush2.msra.mxu0 0.0
      %554 = vmatprep.subr.mxu0 0.0
      %555 = vmatpush2.msra.mxu0 0.0
      %556 = vmatprep.subr.mxu0 0.0
      %557 = vmatpush2.msra.mxu0 0.0
      %558 = vmatprep.subr.mxu0 0.0
      %559 = vmatpush2.msra.mxu0 0.0
      %560 = vmatprep.subr.mxu0 0.0
      %561 = vmatpush2.msra.mxu0 0.0
      %562 = vmatprep.subr.mxu0 0.0
      %563 = vmatpush2.msra.mxu0 0.0
      %564 = vmatprep.subr.mxu0 0.0
      %565 = vmatpush2.msra.mxu0 0.0
      %566 = vmatprep.subr.mxu0 0.0
      %567 = vmatpush2.msra.mxu0 0.0
      %568 = vmatprep.subr.mxu0 0.0
      %569 = vmatpush2.msra.mxu0 0.0
      %570 = vmatprep.mubr.f32.mxu0 0.0
      %571 = vmatmul.mubr.f32.gmra.mxu0 %v399
      %v572 = vpop.f32.mrf.mxu0
      %v573 = vadd.f32 0.0, %v572
      %v574 = vpop.f32.mrf.mxu0
      %575 = vmatprep.mubr.f32.mxu0 0.0
      %576 = vmatmul.mubr.f32.gmra.mxu0 %v402
      %v577 = vpop.f32.mrf.mxu0
      %v578 = vadd.f32 0.0, %v577
      %v579 = vpop.f32.mrf.mxu0
      %580 = vdwg.mxu0
      %v581 = vmul.f32 %v573, 0.00390625
      %v582 = vmul.f32 %v578, 0.00390625
      %v583 = vadd.f32 %v581, 1e-05
      %v584 = vadd.f32 %v582, 1e-05
      %v585 = vrsqrt.pop %v583
      %v586 = vrsqrt.pop %v584
      %v587 = vmul.f32 %v585, %v281
      %v588 = vmul.f32 %v586, %v282
      %590 = vset.pattern.permute.xlu0 0
      %591 = vperm.xlu0 %590, %v587
      %v592 = vpop.permute.xlu0 %591
      %595 = vset.pattern.permute.xlu0 0
      %596 = vperm.xlu0 %595, %v588
      %v597 = vpop.permute.xlu0 %596
      %v599 = vmul.f32 %v494, %v592
      %v600 = vmul.f32 %v495, %v597
      %602 = vset.pattern.permute.xlu0 0
      %603 = vperm.xlu0 %602, %v283
      %v604 = vpop.permute.xlu0 %603
      %607 = vset.pattern.permute.xlu0 0
      %608 = vperm.xlu0 %607, %v284
      %v609 = vpop.permute.xlu0 %608
      %v611 = vadd.f32 %v599, %v604
      %v612 = vadd.f32 %v600, %v609
      %v613 = vmax.f32 %v611, 0.0
      %v614 = vmax.f32 %v612, 0.0
      %616 = vset.pattern.permute.xlu0 0
      %617 = vperm.xlu0 %616, %v303
      %v618 = vpop.permute.xlu0 %617
      %621 = vset.pattern.permute.xlu0 0
      %622 = vperm.xlu0 %621, %v304
      %v623 = vpop.permute.xlu0 %622
      %v625 = vmul.f32 %v305, %v618
      %v626 = vmul.f32 %v306, %v623
      %v627 = vsel %vm314, %v626, 0.0
      %v628 = vadd.f32 %v625, %v627
      %v629 = vrot.slane %v628, 4
      %v630 = vadd.f32 %v628, %v629
      %v631 = vrot.slane %v630, 2
      %v632 = vadd.f32 %v630, %v631
      %v633 = vrot.slane %v632, 1
      %v634 = vadd.f32 %v632, %v633
      %v635 = vsel %vm314, %v614, %v634
      %636 = vmatprep.subr.mxu0 0.0
      %637 = vmatpush1.msra.mxu0 %v302
      %638 = vmatprep.subr.mxu0 0.0
      %639 = vmatpush1.msra.mxu0 %v301
      %640 = vmatprep.subr.mxu0 0.0
      %641 = vmatpush1.msra.mxu0 %v300
      %642 = vmatprep.subr.mxu0 0.0
      %643 = vmatpush1.msra.mxu0 %v299
      %644 = vmatprep.subr.mxu0 0.0
      %645 = vmatpush1.msra.mxu0 %v298
      %646 = vmatprep.subr.mxu0 0.0
      %647 = vmatpush1.msra.mxu0 %v297
      %648 = vmatprep.subr.mxu0 0.0
      %649 = vmatpush1.msra.mxu0 %v296
      %650 = vmatprep.subr.mxu0 0.0
      %651 = vmatpush1.msra.mxu0 %v295
      %652 = vmatprep.subr.mxu0 0.0
      %653 = vmatpush1.msra.mxu0 %v294
      %654 = vmatprep.subr.mxu0 0.0
      %655 = vmatpush1.msra.mxu0 %v293
      %656 = vmatprep.subr.mxu0 0.0
      %657 = vmatpush1.msra.mxu0 %v292
      %658 = vmatprep.subr.mxu0 0.0
      %659 = vmatpush1.msra.mxu0 %v291
      %660 = vmatprep.subr.mxu0 0.0
      %661 = vmatpush1.msra.mxu0 %v290
      %662 = vmatprep.subr.mxu0 0.0
      %663 = vmatpush1.msra.mxu0 %v289
      %664 = vmatprep.subr.mxu0 0.0
      %665 = vmatpush1.msra.mxu0 %v288
      %666 = vmatprep.subr.mxu0 0.0
      %667 = vmatpush1.msra.mxu0 %v287
      %668 = vmatprep.subr.mxu0 0.0
      %669 = vmatpush2.msra.mxu0 0.0
      %670 = vmatprep.subr.mxu0 0.0
      %671 = vmatpush2.msra.mxu0 0.0
      %672 = vmatprep.subr.mxu0 0.0
      %673 = vmatpush2.msra.mxu0 0.0
      %674 = vmatprep.subr.mxu0 0.0
      %675 = vmatpush2.msra.mxu0 0.0
      %676 = vmatprep.subr.mxu0 0.0
      %677 = vmatpush2.msra.mxu0 0.0
      %678 = vmatprep.subr.mxu0 0.0
      %679 = vmatpush2.msra.mxu0 0.0
      %680 = vmatprep.subr.mxu0 0.0
      %681 = vmatpush2.msra.mxu0 0.0
      %682 = vmatprep.subr.mxu0 0.0
      %683 = vmatpush2.msra.mxu0 0.0
      %684 = vmatprep.subr.mxu0 0.0
      %685 = vmatpush2.msra.mxu0 0.0
      %686 = vmatprep.subr.mxu0 0.0
      %687 = vmatpush2.msra.mxu0 0.0
      %688 = vmatprep.subr.mxu0 0.0
      %689 = vmatpush2.msra.mxu0 0.0
      %690 = vmatprep.subr.mxu0 0.0
      %691 = vmatpush2.msra.mxu0 0.0
      %692 = vmatprep.subr.mxu0 0.0
      %693 = vmatpush2.msra.mxu0 0.0
      %694 = vmatprep.subr.mxu0 0.0
      %695 = vmatpush2.msra.mxu0 0.0
      %696 = vmatprep.subr.mxu0 0.0
      %697 = vmatpush2.msra.mxu0 0.0
      %698 = vmatprep.subr.mxu0 0.0
      %699 = vmatpush2.msra.mxu0 0.0
      %700 = vmatprep.mubr.f32.mxu0 0.0
      %701 = vmatmul.mubr.f32.gmra.mxu0 %v613
      %v702 = vpop.f32.mrf.mxu0
      %v703 = vadd.f32 0.0, %v702
      %v704 = vpop.f32.mrf.mxu0
      %705 = vmatprep.mubr.f32.mxu0 0.0
      %706 = vmatmul.mubr.f32.gmra.mxu0 %v635
      %v707 = vpop.f32.mrf.mxu0
      %v708 = vadd.f32 0.0, %v707
      %v709 = vpop.f32.mrf.mxu0
      %710 = vdwg.mxu0
      %v711 = vmul.f32 %v703, 0.125
      %v712 = vmul.f32 %v708, 0.125
      %vm713 = vcmask 130048
      %v715 = vsel %vm713, %v711, 0
      %v718 = vsel %vm713, %v712, 0
      %v721 = vsel %vm713, %v287, 0
      %v724 = vsel %vm713, %v288, 0
      %v727 = vsel %vm713, %v289, 0
      %v730 = vsel %vm713, %v290, 0
      %v733 = vsel %vm713, %v291, 0
      %v736 = vsel %vm713, %v292, 0
      %v739 = vsel %vm713, %v293, 0
      %v742 = vsel %vm713, %v294, 0
      %v745 = vsel %vm713, %v295, 0
      %v748 = vsel %vm713, %v296, 0
      %v751 = vsel %vm713, %v297, 0
      %v754 = vsel %vm713, %v298, 0
      %v757 = vsel %vm713, %v299, 0
      %v760 = vsel %vm713, %v300, 0
      %v763 = vsel %vm713, %v301, 0
      %v766 = vsel %vm713, %v302, 0
      %768 = vmatprep.subr.mxu0 0.0
      %769 = vmatpush1.xpose.msra.mxu0 %v766
      %770 = vmatprep.subr.mxu0 0.0
      %771 = vmatpush1.xpose.msra.mxu0 %v763
      %772 = vmatprep.subr.mxu0 0.0
      %773 = vmatpush1.xpose.msra.mxu0 %v760
      %774 = vmatprep.subr.mxu0 0.0
      %775 = vmatpush1.xpose.msra.mxu0 %v757
      %776 = vmatprep.subr.mxu0 0.0
      %777 = vmatpush1.xpose.msra.mxu0 %v754
      %778 = vmatprep.subr.mxu0 0.0
      %779 = vmatpush1.xpose.msra.mxu0 %v751
      %780 = vmatprep.subr.mxu0 0.0
      %781 = vmatpush1.xpose.msra.mxu0 %v748
      %782 = vmatprep.subr.mxu0 0.0
      %783 = vmatpush1.xpose.msra.mxu0 %v745
      %784 = vmatprep.subr.mxu0 0.0
      %785 = vmatpush1.xpose.msra.mxu0 %v742
      %786 = vmatprep.subr.mxu0 0.0
      %787 = vmatpush1.xpose.msra.mxu0 %v739
      %788 = vmatprep.subr.mxu0 0.0
      %789 = vmatpush1.xpose.msra.mxu0 %v736
      %790 = vmatprep.subr.mxu0 0.0
      %791 = vmatpush1.xpose.msra.mxu0 %v733
      %792 = vmatprep.subr.mxu0 0.0
      %793 = vmatpush1.xpose.msra.mxu0 %v730
      %794 = vmatprep.subr.mxu0 0.0
      %795 = vmatpush1.xpose.msra.mxu0 %v727
      %796 = vmatprep.subr.mxu0 0.0
      %797 = vmatpush1.xpose.msra.mxu0 %v724
      %798 = vmatprep.subr.mxu0 0.0
      %799 = vmatpush1.xpose.msra.mxu0 %v721
      %800 = vmatprep.subr.mxu0 0.0
      %801 = vmatpush2.xpose.msra.mxu0 0.0
      %802 = vmatprep.subr.mxu0 0.0
      %803 = vmatpush2.xpose.msra.mxu0 0.0
      %804 = vmatprep.subr.mxu0 0.0
      %805 = vmatpush2.xpose.msra.mxu0 0.0
      %806 = vmatprep.subr.mxu0 0.0
      %807 = vmatpush2.xpose.msra.mxu0 0.0
      %808 = vmatprep.subr.mxu0 0.0
      %809 = vmatpush2.xpose.msra.mxu0 0.0
      %810 = vmatprep.subr.mxu0 0.0
      %811 = vmatpush2.xpose.msra.mxu0 0.0
      %812 = vmatprep.subr.mxu0 0.0
      %813 = vmatpush2.xpose.msra.mxu0 0.0
      %814 = vmatprep.subr.mxu0 0.0
      %815 = vmatpush2.xpose.msra.mxu0 0.0
      %816 = vmatprep.subr.mxu0 0.0
      %817 = vmatpush2.xpose.msra.mxu0 0.0
      %818 = vmatprep.subr.mxu0 0.0
      %819 = vmatpush2.xpose.msra.mxu0 0.0
      %820 = vmatprep.subr.mxu0 0.0
      %821 = vmatpush2.xpose.msra.mxu0 0.0
      %822 = vmatprep.subr.mxu0 0.0
      %823 = vmatpush2.xpose.msra.mxu0 0.0
      %824 = vmatprep.subr.mxu0 0.0
      %825 = vmatpush2.xpose.msra.mxu0 0.0
      %826 = vmatprep.subr.mxu0 0.0
      %827 = vmatpush2.xpose.msra.mxu0 0.0
      %828 = vmatprep.subr.mxu0 0.0
      %829 = vmatpush2.xpose.msra.mxu0 0.0
      %830 = vmatprep.subr.mxu0 0.0
      %831 = vmatpush2.xpose.msra.mxu0 0.0
      %832 = vmatprep.mubr.f32.mxu0 0.0
      %833 = vmatmul.mubr.f32.gmra.mxu0 %v715
      %v834 = vpop.f32.mrf.mxu0
      %v835 = vadd.f32 0.0, %v834
      %v836 = vpop.f32.mrf.mxu0
      %837 = vmatprep.mubr.f32.mxu0 0.0
      %838 = vmatmul.mubr.f32.gmra.mxu0 %v718
      %v839 = vpop.f32.mrf.mxu0
      %v840 = vadd.f32 0.0, %v839
      %v841 = vpop.f32.mrf.mxu0
      %842 = vdwg.mxu0
      %843 = vst [vmem:[%s278] sm:$0xff] %v305
      %844 = vst [vmem:[%s278 + $0x8] sm:$0xf] %v306
      %845 = vst [vmem:[%s278 + $0xc] sm:$0xff] %v835
      %846 = vst [vmem:[%s278 + $0x14] sm:$0xf] %v840
      %v847 = vxor.u32 %v840, 2147483648
      %v848 = vmul.f32 %v847, 1.442695
      %v849 = vpow.pop %v848
      %v850 = vadd.f32 %v849, 1.0
      %v851 = vrcp.pop %v850
      %v852 = vmul.f32 1.0, %v851
      %853 = vst [vmem:[%s278 + $0x14] sm:$0x10] %v852
      %p854 = scmp.lt.s32.totalorder %s18, 1
      %s855 = scalar_select %p854, %s18, 1
      %s856 = smul.addr %s855, 4
      %s857 = smul.addr %s856, 8
      %s858 = scalar_lea.vmem %s7, %s857
      // Predicated region
      $region49: #{tpu_custom_call.1} parent=47 // pred_check
        %p859 = pneg %p188
      $region50: #{tpu_custom_call.1} parent=47 // pred_check_branch
        %861 = sbr.rel (%p859) target = $region52
      $region51: #{tpu_custom_call.1} parent=47 // pred_region
        _
      $region52: #{tpu_custom_call.1} parent=47 // pred_fallthru
        _
    $region48: #{tpu_custom_call.1} parent=5 // pred_fallthru
      _
    %p862 = scmp.le.s32.totalorder 2, %s13
    // Predicated region
    $region53: #{tpu_custom_call.1} parent=5 // pred_check
      %p863 = pneg %p862
    $region54: #{tpu_custom_call.1} parent=5 // pred_check_branch
      %865 = sbr.rel (%p863) target = $region56
    $region55: #{tpu_custom_call.1} parent=5 // pred_region
      %s866 = ssub.s32 %s13, 2
      // Predicated region
      $region57: #{tpu_custom_call.1} parent=55 // pred_check
        %p867 = pneg %p194
      $region58: #{tpu_custom_call.1} parent=55 // pred_check_branch
        %869 = sbr.rel (%p867) target = $region60
      $region59: #{tpu_custom_call.1} parent=55 // pred_region
        %p870 = scmp.lt.s32.totalorder %s19, 1
        %s871 = scalar_select %p870, %s19, 1
        %s872 = smul.addr %s871, 4
        %s873 = smul.addr %s872, 8
        %s874 = scalar_lea.vmem %s7, %s873
      $region60: #{tpu_custom_call.1} parent=55 // pred_fallthru
        _
    $region56: #{tpu_custom_call.1} parent=5 // pred_fallthru
      _
  $region6: #{tpu_custom_call.1} parent=0 // loop_footer
    %s17 = sadd.s32 1, %s13
  $region7: #{tpu_custom_call.1} parent=0 // loop_footer_branch
    %12 = sbr.rel target = $region3
  $region8: #{tpu_custom_call.1} parent=0 // loop_exit
    _

</llo_original>
